<compile_context>
chip_gen: v7x
topology: tpu7x:2x2x1
jax: 0.10.0
libtpu: 0.0.40
codegen_flags: <defaults>
</compile_context>

<pallas_src>
import functools

import jax
import jax.numpy as jnp
from jax.experimental import pallas as pl
from jax.experimental.pallas import tpu as pltpu

_LANE = 128
# Per x/out block budget: keeps the double-buffered working set well inside
# v5e's 16 MiB default scoped VMEM and v7x's 64 MiB physical VMEM.
_MAX_BLOCK_BYTES = 2 * 1024 * 1024


def _round_up(n, m):
    return ((n + m - 1) // m) * m


def _choose_hw_tile(hw_pad, c, dtype_bytes, max_block_bytes):
    """Largest multiple of 128 dividing hw_pad with a (1, C, T) block under budget."""
    n_units = hw_pad // _LANE
    best = 1
    for d in range(1, n_units + 1):
        if n_units % d == 0 and c * d * _LANE * dtype_bytes <= max_block_bytes:
            best = d
    return best * _LANE


def _vmem_limit(working_set_bytes):
    # 2x headroom over the estimated double-buffered working set; floor at the
    # smallest default scoped limit (v5e, 16 MiB); ceiling safe on v7x.
    return int(min(max(2 * working_set_bytes, 16 * 1024 * 1024), 48 * 1024 * 1024))


# --------------------------- kernels ---------------------------------------


def _se_fused_kernel(x_ref, w1_ref, b1_ref, w2_ref, b2_ref, o_ref, *, inv_hw):
    # x_ref / o_ref: (1, C, HWpad); weights stay resident across the batch grid.
    x = x_ref[...]
    # Squeeze: spatial sum in f32 (zero padding does not change the sum),
    # single multiply by 1/HW instead of a full mean.
    pooled = jnp.sum(x, axis=-1, dtype=jnp.float32) * inv_hw              # (1, C)
    # Excitation: FC -> ReLU -> FC -> sigmoid (CR pre-padded to 128 lanes).
    h = jnp.dot(pooled, w1_ref[...], preferred_element_type=jnp.float32) + b1_ref[...]
    h = jnp.maximum(h, 0.0)
    g = jax.nn.sigmoid(
        jnp.dot(h, w2_ref[...], preferred_element_type=jnp.float32) + b2_ref[...])
    # Scale in the input/output dtype (no full-block f32 copy).
    o_ref[...] = x * g.astype(o_ref.dtype)[:, :, None]


def _se_pool_kernel(x_ref, mean_ref, acc_ref, *, inv_hw):
    # Grid = (B, HW_tiles); HW (reduction) axis is last and "arbitrary".
    k = pl.program_id(1)

    @pl.when(k == 0)
    def _init():
        acc_ref[...] = jnp.zeros_like(acc_ref)

    acc_ref[...] += jnp.sum(x_ref[...], axis=-1, keepdims=True, dtype=jnp.float32)

    @pl.when(k == pl.num_programs(1) - 1)
    def _finalize():
        mean_ref[...] = acc_ref[...] * inv_hw


def _se_scale_kernel(x_ref, g_ref, o_ref):
    # x_ref / o_ref: (1, C, T); g_ref: (1, C, 1) already in the output dtype.
    o_ref[...] = x_ref[...] * g_ref[...]


# --------------------------- wrapper ----------------------------------------


def se_block(x, w1, b1, w2, b2, *, force_split=False,
             max_block_bytes=_MAX_BLOCK_BYTES):
    """x: (B, C, H, W). w1: (C, CR), b1: (CR,), w2: (CR, C), b2: (C,)."""
    B, C, H, W = x.shape
    CR = w1.shape[1]
    HW = H * W
    dtype = x.dtype
    dtype_bytes = jnp.dtype(dtype).itemsize

    # Lane-dense spatial layout: flatten H*W and pad up to a multiple of 128
    # so the streaming loads/stores are unmasked full-lane ops.
    hw_pad = _round_up(max(HW, _LANE), _LANE)
    x_flat = x.reshape(B, C, HW)
    if hw_pad != HW:
        x_flat = jnp.pad(x_flat, ((0, 0), (0, 0), (0, hw_pad - HW)))

    inv_hw = 1.0 / float(HW)
    fused_block_bytes = C * hw_pad * dtype_bytes
    use_fused = (not force_split) and fused_block_bytes <= max_block_bytes

    if use_fused:
        # ---- single fused pass, grid over batch: x read from HBM once ------
        cr_pad = _round_up(CR, _LANE)            # lane-dense excitation operands
        w1_p = jnp.zeros((C, cr_pad), jnp.float32).at[:, :CR].set(w1.astype(jnp.float32))
        b1_p = jnp.zeros((1, cr_pad), jnp.float32).at[:, :CR].set(b1.astype(jnp.float32))
        w2_p = jnp.zeros((cr_pad, C), jnp.float32).at[:CR, :].set(w2.astype(jnp.float32))
        b2_p = b2.reshape(1, C).astype(jnp.float32)

        weights_bytes = 4 * (2 * C * cr_pad + cr_pad + C)
        working_set = 4 * fused_block_bytes + weights_bytes  # 2 in + 2 out buffers

        out_flat = pl.pallas_call(
            functools.partial(_se_fused_kernel, inv_hw=inv_hw),
            out_shape=jax.ShapeDtypeStruct((B, C, hw_pad), dtype),
            grid=(B,),
            in_specs=[
                pl.BlockSpec((1, C, hw_pad), lambda b: (b, 0, 0)),
                pl.BlockSpec((C, cr_pad), lambda b: (0, 0)),
                pl.BlockSpec((1, cr_pad), lambda b: (0, 0)),
                pl.BlockSpec((cr_pad, C), lambda b: (0, 0)),
                pl.BlockSpec((1, C), lambda b: (0, 0)),
            ],
            out_specs=pl.BlockSpec((1, C, hw_pad), lambda b: (b, 0, 0)),
            compiler_params=pltpu.CompilerParams(
                dimension_semantics=("parallel",),
                vmem_limit_bytes=_vmem_limit(working_set),
            ),
        )(x_flat, w1_p, b1_p, w2_p, b2_p)
    else:
        # ---- pass 1: streaming global-average pool --------------------------
        t_hw = _choose_hw_tile(hw_pad, C, dtype_bytes, max_block_bytes)
        n_hw = hw_pad // t_hw
        block_bytes = C * t_hw * dtype_bytes

        pooled = pl.pallas_call(
            functools.partial(_se_pool_kernel, inv_hw=inv_hw),
            out_shape=jax.ShapeDtypeStruct((B, C, 1), jnp.float32),
            grid=(B, n_hw),
            in_specs=[pl.BlockSpec((1, C, t_hw), lambda b, k: (b, 0, k))],
            out_specs=pl.BlockSpec((1, C, 1), lambda b, k: (b, 0, 0)),
            scratch_shapes=[pltpu.VMEM((1, C, 1), jnp.float32)],
            compiler_params=pltpu.CompilerParams(
                dimension_semantics=("parallel", "arbitrary"),
                vmem_limit_bytes=_vmem_limit(2 * block_bytes),
            ),
        )(x_flat)

        # ---- excitation MLP in plain XLA (tiny; MXU-hostile CR = C/16) ------
        pooled2d = pooled.reshape(B, C)
        h = jnp.maximum(pooled2d @ w1.astype(jnp.float32) + b1.astype(jnp.float32), 0.0)
        g = jax.nn.sigmoid(h @ w2.astype(jnp.float32) + b2.astype(jnp.float32))
        g3 = g.astype(dtype).reshape(B, C, 1)

        # ---- pass 2: streaming channel scale --------------------------------
        out_flat = pl.pallas_call(
            _se_scale_kernel,
            out_shape=jax.ShapeDtypeStruct((B, C, hw_pad), dtype),
            grid=(B, n_hw),
            in_specs=[
                pl.BlockSpec((1, C, t_hw), lambda b, k: (b, 0, k)),
                pl.BlockSpec((1, C, 1), lambda b, k: (b, 0, 0)),
            ],
            out_specs=pl.BlockSpec((1, C, t_hw), lambda b, k: (b, 0, k)),
            compiler_params=pltpu.CompilerParams(
                dimension_semantics=("parallel", "parallel"),
                vmem_limit_bytes=_vmem_limit(4 * block_bytes),
            ),
        )(x_flat, g3)

    if hw_pad != HW:
        out_flat = out_flat[:, :, :HW]
    return out_flat.reshape(B, C, H, W)


# --------------------------- reference & test --------------------------------


def se_block_ref(x, w1, b1, w2, b2):
    """Pure-JAX reference matching the PyTorch forward."""
    y = jnp.mean(x, axis=(2, 3))                      # (B, C)
    y = jnp.maximum(y @ w1 + b1, 0.0)                 # (B, CR)
    y = jax.nn.sigmoid(y @ w2 + b2)                   # (B, C)
    return x * y[:, :, None, None]


def _make_params(key, c, reduction):
    cr = max(c // reduction, 1)
    k1, k2, k3, k4 = jax.random.split(key, 4)
    w1 = jax.random.normal(k1, (c, cr), dtype=jnp.float32) * 0.1
    b1 = jax.random.normal(k2, (cr,), dtype=jnp.float32) * 0.1
    w2 = jax.random.normal(k3, (cr, c), dtype=jnp.float32) * 0.1
    b2 = jax.random.normal(k4, (c,), dtype=jnp.float32) * 0.1
    return w1, b1, w2, b2


if __name__ == "__main__":
    key = jax.random.PRNGKey(0)
    kx1, kp1, kx2, kp2 = jax.random.split(key, 4)

    # Case 1: SEBlock(channel=32, reduction=16) — fused per-batch path.
    B, C, H, W = 2, 32, 8, 8
    x = jax.random.normal(kx1, (B, C, H, W), dtype=jnp.float32)
    w1, b1, w2, b2 = _make_params(kp1, C, reduction=16)

    out_fused = se_block(x, w1, b1, w2, b2)
    jax.block_until_ready(out_fused)
    ref = se_block_ref(x, w1, b1, w2, b2)
    assert out_fused.shape == (B, C, H, W)
    assert jnp.allclose(out_fused, ref, atol=1e-5, rtol=1e-5), "fused path mismatch"

    # Same input through the pool / MLP / scale split path.
    out_split = se_block(x, w1, b1, w2, b2, force_split=True)
    jax.block_until_ready(out_split)
    assert jnp.allclose(out_split, ref, atol=1e-5, rtol=1e-5), "split path mismatch"

    # Case 2: force a multi-tile HW reduction in the split path (accumulator
    # init/finalize across several grid steps) with a tiny per-block budget.
    B2, C2, H2, W2 = 2, 8, 16, 16             # HW = 256 -> two 128-lane tiles
    x2 = jax.random.normal(kx2, (B2, C2, H2, W2), dtype=jnp.float32)
    w1b, b1b, w2b, b2b = _make_params(kp2, C2, reduction=4)
    out2 = se_block(x2, w1b, b1b, w2b, b2b, force_split=True,
                    max_block_bytes=C2 * 128 * 4)
    jax.block_until_ready(out2)
    ref2 = se_block_ref(x2, w1b, b1b, w2b, b2b)
    assert jnp.allclose(out2, ref2, atol=1e-5, rtol=1e-5), "multi-tile pool mismatch"

    print("KERNEL_OK")
</pallas_src>

<mosaic_0001>
module attributes {stable_mosaic.version = 11 : i64} {
  func.func @_se_fused_kernel(%arg0: i32, %arg1: memref<1x32x128xf32, #tpu.memory_space<vmem>>, %arg2: memref<32x128xf32, #tpu.memory_space<vmem>>, %arg3: memref<1x128xf32, #tpu.memory_space<vmem>>, %arg4: memref<128x32xf32, #tpu.memory_space<vmem>>, %arg5: memref<1x32xf32, #tpu.memory_space<vmem>>, %arg6: memref<1x32x128xf32, #tpu.memory_space<vmem>>) attributes {dimension_semantics = [#tpu.dimension_semantics<parallel>], iteration_bounds = array<i64: 2>, scalar_prefetch = 0 : i64, scratch_operands = 0 : i64, tpu.core_type = #tpu.core_type<tc>, window_params = [{transform_indices = @transform_0, window_bounds = array<i64: 1, 32, 128>}, {pipeline_mode = #tpu.pipeline_mode<synchronous>, transform_indices = @transform_1, window_bounds = array<i64: 32, 128>}, {pipeline_mode = #tpu.pipeline_mode<synchronous>, transform_indices = @transform_2, window_bounds = array<i64: 1, 128>}, {pipeline_mode = #tpu.pipeline_mode<synchronous>, transform_indices = @transform_3, window_bounds = array<i64: 128, 32>}, {pipeline_mode = #tpu.pipeline_mode<synchronous>, transform_indices = @transform_4, window_bounds = array<i64: 1, 32>}, {transform_indices = @transform_5, window_bounds = array<i64: 1, 32, 128>}]} {
    %c0 = arith.constant 0 : index
    %c0_0 = arith.constant 0 : index
    %c0_1 = arith.constant 0 : index
    %0 = vector.load %arg1[%c0, %c0_0, %c0_1] : memref<1x32x128xf32, #tpu.memory_space<vmem>>, vector<1x32x128xf32>
    %cst = arith.constant dense<0.000000e+00> : vector<1x32xf32>
    %1 = vector.multi_reduction <add>, %0, %cst [2] : vector<1x32x128xf32> to vector<1x32xf32>
    %cst_2 = arith.constant 1.562500e-02 : f32
    %2 = vector.broadcast %cst_2 : f32 to vector<1x32xf32>
    %3 = arith.mulf %1, %2 : vector<1x32xf32>
    %c0_3 = arith.constant 0 : index
    %c0_4 = arith.constant 0 : index
    %4 = vector.load %arg2[%c0_3, %c0_4] : memref<32x128xf32, #tpu.memory_space<vmem>>, vector<32x128xf32>
    %cst_5 = arith.constant dense<0.000000e+00> : vector<1x128xf32>
    %5 = tpu.matmul %3, %4, %cst_5 {dimension_numbers = #tpu.dot_dimension_numbers<[1], [0], [0], [1], [0, 0, 1, 1], [], []>} : vector<1x32xf32>, vector<32x128xf32>, vector<1x128xf32> -> vector<1x128xf32>
    %c0_6 = arith.constant 0 : index
    %c0_7 = arith.constant 0 : index
    %6 = vector.load %arg3[%c0_6, %c0_7] : memref<1x128xf32, #tpu.memory_space<vmem>>, vector<1x128xf32>
    %7 = arith.addf %5, %6 : vector<1x128xf32>
    %cst_8 = arith.constant 0.000000e+00 : f32
    %8 = vector.broadcast %cst_8 : f32 to vector<1x128xf32>
    %9 = arith.maximumf %7, %8 : vector<1x128xf32>
    %c0_9 = arith.constant 0 : index
    %c0_10 = arith.constant 0 : index
    %10 = vector.load %arg4[%c0_9, %c0_10] : memref<128x32xf32, #tpu.memory_space<vmem>>, vector<128x32xf32>
    %cst_11 = arith.constant dense<0.000000e+00> : vector<1x32xf32>
    %11 = tpu.matmul %9, %10, %cst_11 {dimension_numbers = #tpu.dot_dimension_numbers<[1], [0], [0], [1], [0, 0, 1, 1], [], []>} : vector<1x128xf32>, vector<128x32xf32>, vector<1x32xf32> -> vector<1x32xf32>
    %c0_12 = arith.constant 0 : index
    %c0_13 = arith.constant 0 : index
    %12 = vector.load %arg5[%c0_12, %c0_13] : memref<1x32xf32, #tpu.memory_space<vmem>>, vector<1x32xf32>
    %13 = arith.addf %11, %12 : vector<1x32xf32>
    %14 = arith.negf %13 : vector<1x32xf32>
    %15 = math.exp %14 : vector<1x32xf32>
    %cst_14 = arith.constant 1.000000e+00 : f32
    %16 = vector.broadcast %cst_14 : f32 to vector<1x32xf32>
    %17 = arith.addf %16, %15 : vector<1x32xf32>
    %18 = arith.divf %16, %17 : vector<1x32xf32>
    %19 = vector.shape_cast %18 : vector<1x32xf32> to vector<1x32x1xf32>
    %20 = vector.broadcast %19 : vector<1x32x1xf32> to vector<1x32x128xf32>
    %21 = arith.mulf %0, %20 : vector<1x32x128xf32>
    %c0_15 = arith.constant 0 : index
    %c0_16 = arith.constant 0 : index
    %c0_17 = arith.constant 0 : index
    %22 = vector.load %arg6[%c0_15, %c0_16, %c0_17] : memref<1x32x128xf32, #tpu.memory_space<vmem>>, vector<1x32x128xf32>
    tpu.vector_store %arg6[%c0_15, %c0_16, %c0_17], %21 {strides = array<i32>} : memref<1x32x128xf32, #tpu.memory_space<vmem>>, vector<1x32x128xf32>,
    return
  }
  func.func @transform_0(%arg0: i32) -> (i32, i32, i32) {
    %c0_i32 = arith.constant 0 : i32
    %c0_i32_0 = arith.constant 0 : i32
    %c0_i32_1 = arith.constant 0 : i32
    return %arg0, %c0_i32, %c0_i32_0 : i32, i32, i32
  }
  func.func @transform_1(%arg0: i32) -> (i32, i32) {
    %c0_i32 = arith.constant 0 : i32
    %c0_i32_0 = arith.constant 0 : i32
    %c0_i32_1 = arith.constant 0 : i32
    return %c0_i32, %c0_i32_0 : i32, i32
  }
  func.func @transform_2(%arg0: i32) -> (i32, i32) {
    %c0_i32 = arith.constant 0 : i32
    %c0_i32_0 = arith.constant 0 : i32
    %c0_i32_1 = arith.constant 0 : i32
    return %c0_i32, %c0_i32_0 : i32, i32
  }
  func.func @transform_3(%arg0: i32) -> (i32, i32) {
    %c0_i32 = arith.constant 0 : i32
    %c0_i32_0 = arith.constant 0 : i32
    %c0_i32_1 = arith.constant 0 : i32
    return %c0_i32, %c0_i32_0 : i32, i32
  }
  func.func @transform_4(%arg0: i32) -> (i32, i32) {
    %c0_i32 = arith.constant 0 : i32
    %c0_i32_0 = arith.constant 0 : i32
    %c0_i32_1 = arith.constant 0 : i32
    return %c0_i32, %c0_i32_0 : i32, i32
  }
  func.func @transform_5(%arg0: i32) -> (i32, i32, i32) {
    %c0_i32 = arith.constant 0 : i32
    %c0_i32_0 = arith.constant 0 : i32
    %c0_i32_1 = arith.constant 0 : i32
    return %arg0, %c0_i32, %c0_i32_0 : i32, i32, i32
  }
}

</mosaic_0001>

<llo_original>
// kernel: tpu_custom_call.1
$region0: #{tpu_custom_call.1}
  #allocation0 [shape = 'u32[]', space=smem, size = 0x4, offset = 0x4, fixed_abs, tag = 'smem constant byte address 0x4 - core index']
  #allocation1 [shape = 'u32[144,128]{1,0:T(1,128)}', space=vmem, size = 0x12000, scoped, tag = 'internal scratch']
  %s0 = inlined_call_operand.vmem [shape: f32[2,32,128], index: 0, kind: input, shape index: {}]
  %s1 = inlined_call_operand.vmem [shape: f32[32,128], index: 1, kind: input, shape index: {}]
  %s2 = inlined_call_operand.vmem [shape: f32[1,128], index: 2, kind: input, shape index: {}]
  %s3 = inlined_call_operand.vmem [shape: f32[128,32], index: 3, kind: input, shape index: {}]
  %s4 = inlined_call_operand.vmem [shape: f32[1,32], index: 4, kind: input, shape index: {}]
  %s5 = inlined_call_operand.hbm [shape: f32[2,32,128], index: 5, kind: output, shape index: {}]
  %s6 = sld [smem:[#allocation0]]
  $region53: #{tpu_custom_call.1} parent=0
    _
  %s8 = ssub.s32 1, %s6
  %s9 = scalar_select 0, %s8, %s6
  $region1: #{tpu_custom_call.1} parent=0
    #allocation2 [shape = 'u8[32768]{0}', space=vmem, size = 0x8000, scoped, tag = 'output window, operand 0']
    #allocation3 [shape = 's32[2]{0}', space=sflag, size = 0x8, scoped, tag = 'scoped memory for tpu_custom_call.1']
    %10 = vsyncpa [#allocation3], 0
    %s11 = scalar_lea.sflag [#allocation3], 1
    %12 = vsyncpa %s11, 0
    loop: start=0, step=1, limit=4
    $region2: #{tpu_custom_call.1} parent=1 // loop_pre_header
      _
    $region3: #{tpu_custom_call.1} parent=1 // loop_header
      %s14 = sphi 0, %s18
      %p15 = scmp.ge.s32.totalorder %s14, 4
      %s24 = sphi 0, %s26
      %s27 = sphi 0, %s24
      %s28 = sphi 0, %s27
      %s44 = sphi 0, %s28
      %s48 = sphi 0, %s48
      %s50 = sphi 0, %s48
      %s51 = sphi 0, %s50
      %s65 = sphi 0, %s51
      %s69 = sphi 0, %s69
      %s71 = sphi 0, %s69
      %s72 = sphi 0, %s71
      %s86 = sphi 0, %s72
      %s90 = sphi 0, %s90
      %s92 = sphi 0, %s90
      %s93 = sphi 0, %s92
      %s107 = sphi 0, %s93
      %s111 = sphi 0, %s111
      %s113 = sphi 0, %s111
      %s114 = sphi 0, %s113
      %s128 = sphi 0, %s114
      %s134 = sphi 0, %s136
      %s137 = sphi 0, %s134
      %s138 = sphi 0, %s137
      %s154 = sphi 0, %s138
    $region4: #{tpu_custom_call.1} parent=1 // loop_header_branch
      %17 = sbr.rel (%p15) target = $region8
    $region5: #{tpu_custom_call.1} parent=1 // loop_body
      %s19 = ssub.s32 %s14, 1
      %s20 = ssub.s32 %s14, 2
      %s21 = sadd.s32 %s14, 1
      %s22 = ssub.s32 %s14, %s21
      %p23 = scmp.eq.s32.totalorder %s22, 0
      %s25 = sadd.s32 %s24, 1
      %s26 = scalar_select %p23, %s24, %s25
      %p29 = pneg %p23
      %p30 = scmp.eq.s32.totalorder %s14, 1
      %p31 = por %p29, %p30
      %p32 = scmp.ne.s32.totalorder %s24, %s27
      %p33 = scmp.eq.s32.totalorder %s14, 0
      %p34 = por %p32, %p33
      %p35 = scmp.ne.s32.totalorder %s24, %s27
      %p36 = scmp.eq.s32.totalorder %s19, 1
      %p37 = por %p35, %p36
      %p38 = scmp.ne.s32.totalorder %s27, %s28
      %p39 = scmp.eq.s32.totalorder %s19, 0
      %p40 = por %p38, %p39
      %p41 = scmp.ne.s32.totalorder %s27, %s28
      %p42 = scmp.eq.s32.totalorder %s20, 1
      %p43 = por %p41, %p42
      %p45 = scmp.ne.s32.totalorder %s28, %s44
      %p46 = scmp.eq.s32.totalorder %s20, 0
      %p47 = por %p45, %p46
      %s49 = sadd.s32 %s48, 1
      %p52 = scmp.eq.s32.totalorder %s14, 1
      %p53 = scmp.ne.s32.totalorder %s48, %s50
      %p54 = scmp.eq.s32.totalorder %s14, 0
      %p55 = por %p53, %p54
      %p56 = scmp.ne.s32.totalorder %s48, %s50
      %p57 = scmp.eq.s32.totalorder %s19, 1
      %p58 = por %p56, %p57
      %p59 = scmp.ne.s32.totalorder %s50, %s51
      %p60 = scmp.eq.s32.totalorder %s19, 0
      %p61 = por %p59, %p60
      %p62 = scmp.ne.s32.totalorder %s50, %s51
      %p63 = scmp.eq.s32.totalorder %s20, 1
      %p64 = por %p62, %p63
      %p66 = scmp.ne.s32.totalorder %s51, %s65
      %p67 = scmp.eq.s32.totalorder %s20, 0
      %p68 = por %p66, %p67
      %s70 = sadd.s32 %s69, 1
      %p73 = scmp.eq.s32.totalorder %s14, 1
      %p74 = scmp.ne.s32.totalorder %s69, %s71
      %p75 = scmp.eq.s32.totalorder %s14, 0
      %p76 = por %p74, %p75
      %p77 = scmp.ne.s32.totalorder %s69, %s71
      %p78 = scmp.eq.s32.totalorder %s19, 1
      %p79 = por %p77, %p78
      %p80 = scmp.ne.s32.totalorder %s71, %s72
      %p81 = scmp.eq.s32.totalorder %s19, 0
      %p82 = por %p80, %p81
      %p83 = scmp.ne.s32.totalorder %s71, %s72
      %p84 = scmp.eq.s32.totalorder %s20, 1
      %p85 = por %p83, %p84
      %p87 = scmp.ne.s32.totalorder %s72, %s86
      %p88 = scmp.eq.s32.totalorder %s20, 0
      %p89 = por %p87, %p88
      %s91 = sadd.s32 %s90, 1
      %p94 = scmp.eq.s32.totalorder %s14, 1
      %p95 = scmp.ne.s32.totalorder %s90, %s92
      %p96 = scmp.eq.s32.totalorder %s14, 0
      %p97 = por %p95, %p96
      %p98 = scmp.ne.s32.totalorder %s90, %s92
      %p99 = scmp.eq.s32.totalorder %s19, 1
      %p100 = por %p98, %p99
      %p101 = scmp.ne.s32.totalorder %s92, %s93
      %p102 = scmp.eq.s32.totalorder %s19, 0
      %p103 = por %p101, %p102
      %p104 = scmp.ne.s32.totalorder %s92, %s93
      %p105 = scmp.eq.s32.totalorder %s20, 1
      %p106 = por %p104, %p105
      %p108 = scmp.ne.s32.totalorder %s93, %s107
      %p109 = scmp.eq.s32.totalorder %s20, 0
      %p110 = por %p108, %p109
      %s112 = sadd.s32 %s111, 1
      %p115 = scmp.eq.s32.totalorder %s14, 1
      %p116 = scmp.ne.s32.totalorder %s111, %s113
      %p117 = scmp.eq.s32.totalorder %s14, 0
      %p118 = por %p116, %p117
      %p119 = scmp.ne.s32.totalorder %s111, %s113
      %p120 = scmp.eq.s32.totalorder %s19, 1
      %p121 = por %p119, %p120
      %p122 = scmp.ne.s32.totalorder %s113, %s114
      %p123 = scmp.eq.s32.totalorder %s19, 0
      %p124 = por %p122, %p123
      %p125 = scmp.ne.s32.totalorder %s113, %s114
      %p126 = scmp.eq.s32.totalorder %s20, 1
      %p127 = por %p125, %p126
      %p129 = scmp.ne.s32.totalorder %s114, %s128
      %p130 = scmp.eq.s32.totalorder %s20, 0
      %p131 = por %p129, %p130
      %s132 = ssub.s32 %s14, %s21
      %p133 = scmp.eq.s32.totalorder %s132, 0
      %s135 = sadd.s32 %s134, 1
      %s136 = scalar_select %p133, %s134, %s135
      %p139 = pneg %p133
      %p140 = scmp.eq.s32.totalorder %s14, 1
      %p141 = por %p139, %p140
      %p142 = scmp.ne.s32.totalorder %s134, %s137
      %p143 = scmp.eq.s32.totalorder %s14, 0
      %p144 = por %p142, %p143
      %p145 = scmp.ne.s32.totalorder %s134, %s137
      %p146 = scmp.eq.s32.totalorder %s19, 1
      %p147 = por %p145, %p146
      %p148 = scmp.ne.s32.totalorder %s137, %s138
      %p149 = scmp.eq.s32.totalorder %s19, 0
      %p150 = por %p148, %p149
      %p151 = scmp.ne.s32.totalorder %s137, %s138
      %p152 = scmp.eq.s32.totalorder %s20, 1
      %p153 = por %p151, %p152
      %p155 = scmp.ne.s32.totalorder %s138, %s154
      %p156 = scmp.eq.s32.totalorder %s20, 0
      %p157 = por %p155, %p156
      %p158 = scmp.le.s32.totalorder 1, %s14
      %p159 = scmp.lt.s32.totalorder %s14, 3
      %p160 = pnand %p158, %p159
      %p161 = pneg %p160
      // Predicated region
      $region9: #{tpu_custom_call.1} parent=5 // pred_check
        _
      $region10: #{tpu_custom_call.1} parent=5 // pred_check_branch
        %163 = sbr.rel (%p160) target = $region12
      $region11: #{tpu_custom_call.1} parent=5 // pred_region
        %s164 = ssub.s32 %s14, 1
        // Predicated region
        $region13: #{tpu_custom_call.1} parent=11 // pred_check
          %p165 = pneg %p61
        $region14: #{tpu_custom_call.1} parent=11 // pred_check_branch
          %167 = sbr.rel (%p165) target = $region16
        $region15: #{tpu_custom_call.1} parent=11 // pred_region
          _
        $region16: #{tpu_custom_call.1} parent=11 // pred_fallthru
          _
        // Predicated region
        $region17: #{tpu_custom_call.1} parent=11 // pred_check
          %p168 = pneg %p82
        $region18: #{tpu_custom_call.1} parent=11 // pred_check_branch
          %170 = sbr.rel (%p168) target = $region20
        $region19: #{tpu_custom_call.1} parent=11 // pred_region
          _
        $region20: #{tpu_custom_call.1} parent=11 // pred_fallthru
          _
        // Predicated region
        $region21: #{tpu_custom_call.1} parent=11 // pred_check
          %p171 = pneg %p103
        $region22: #{tpu_custom_call.1} parent=11 // pred_check_branch
          %173 = sbr.rel (%p171) target = $region24
        $region23: #{tpu_custom_call.1} parent=11 // pred_region
          _
        $region24: #{tpu_custom_call.1} parent=11 // pred_fallthru
          _
        // Predicated region
        $region25: #{tpu_custom_call.1} parent=11 // pred_check
          %p174 = pneg %p124
        $region26: #{tpu_custom_call.1} parent=11 // pred_check_branch
          %176 = sbr.rel (%p174) target = $region28
        $region27: #{tpu_custom_call.1} parent=11 // pred_region
          _
        $region28: #{tpu_custom_call.1} parent=11 // pred_fallthru
          _
      $region12: #{tpu_custom_call.1} parent=5 // pred_fallthru
        _
      %p177 = scmp.lt.s32.totalorder %s14, 2
      // Predicated region
      $region29: #{tpu_custom_call.1} parent=5 // pred_check
        %p178 = pneg %p177
      $region30: #{tpu_custom_call.1} parent=5 // pred_check_branch
        %180 = sbr.rel (%p178) target = $region32
      $region31: #{tpu_custom_call.1} parent=5 // pred_region
        // Predicated region
        $region33: #{tpu_custom_call.1} parent=31 // pred_check
          %p181 = pneg %p34
        $region34: #{tpu_custom_call.1} parent=31 // pred_check_branch
          %183 = sbr.rel (%p181) target = $region36
        $region35: #{tpu_custom_call.1} parent=31 // pred_region
          %p184 = scmp.lt.s32.totalorder %s14, 1
          %s185 = scalar_select %p184, %s14, 1
          %s186 = smul.addr %s185, 4
          %s187 = smul.addr %s186, 8
          %s188 = scalar_lea.vmem %s0, %s187
        $region36: #{tpu_custom_call.1} parent=31 // pred_fallthru
          _
      $region32: #{tpu_custom_call.1} parent=5 // pred_fallthru
        _
      %p189 = scmp.le.s32.totalorder 1, %s14
      %p190 = scmp.lt.s32.totalorder %s14, 3
      %p191 = pnand %p189, %p190
      %p192 = pneg %p191
      // Predicated region
      $region37: #{tpu_custom_call.1} parent=5 // pred_check
        _
      $region38: #{tpu_custom_call.1} parent=5 // pred_check_branch
        %194 = sbr.rel (%p191) target = $region40
      $region39: #{tpu_custom_call.1} parent=5 // pred_region
        %s195 = ssub.s32 %s14, 1
        %p196 = scmp.lt.s32.totalorder %s19, 1
        %s197 = scalar_select %p196, %s19, 1
        %s198 = smul.addr %s197, 4
        %s199 = smul.addr %s198, 8
        %s200 = scalar_lea.vmem %s0, %s199
        %p201 = pneg %p40
        %p202 = pneg %p37
        %p203 = pneg %p61
        %p204 = pneg %p58
        %p205 = pneg %p82
        %p206 = pneg %p79
        %p207 = pneg %p103
        %p208 = pneg %p100
        %p209 = pneg %p124
        %p210 = pneg %p121
        %p211 = pneg %p150
        %p212 = pneg %p147
        %s213 = sand.u32 %s137, 1
        %s214 = scalar_lea.sflag [#allocation3], %s213
        %s215 = sand.u32 %s137, 1
        %s216 = smul.addr %s215, 32
        %s217 = scalar_lea.vmem [#allocation2], %s216
        %p218 = scmp.lt.s32.totalorder %s19, 1
        %s219 = scalar_select %p218, %s19, 1
        %s220 = smul.addr %s219, 4
        %s221 = smul.addr %s220, 8
        %s222 = scalar_lea.vmem %s0, %s221
        %v223 = vld [vmem:[%s222] sm:$0xff]
        %v224 = vld [vmem:[%s222 + $0x8] sm:$0xff]
        %v225 = vld [vmem:[%s222 + $0x10] sm:$0xff]
        %v226 = vld [vmem:[%s222 + $0x18] sm:$0xff]
        %227 = vadd.xlane.f32.xlu0 %v223
        %v228 = vpop.xlane.xlu0 %227
        %229 = vadd.xlane.f32.xlu0 %v224
        %v230 = vpop.xlane.xlu0 %229
        %231 = vadd.xlane.f32.xlu0 %v225
        %v232 = vpop.xlane.xlu0 %231
        %233 = vadd.xlane.f32.xlu0 %v226
        %v234 = vpop.xlane.xlu0 %233
        %v235 = vmul.f32 %v228, 0.015625
        %v236 = vmul.f32 %v230, 0.015625
        %v237 = vmul.f32 %v232, 0.015625
        %v238 = vmul.f32 %v234, 0.015625
        %v239 = vld [vmem:[%s1] sm:$0xff]
        %v240 = vld [vmem:[%s1 + $0x8] sm:$0xff]
        %v241 = vld [vmem:[%s1 + $0x10] sm:$0xff]
        %v242 = vld [vmem:[%s1 + $0x18] sm:$0xff]
        %v243 = vld [vmem:[%s2] sm:$0x1]
        %v248 = vlaneseq
        %v249 = vand.u32 %v248, 127
        %v250 = vlaneseq
        %v251 = vshrl.u32 %v250, 7
        %v252 = vsub.s32 %v249, %v251
        %v253 = vrot.slane %v235, %v252
        %v254 = vadd.s32 %v249, 4294967288
        %v255 = vlaneseq
        %v256 = vshrl.u32 %v255, 7
        %v257 = vsub.s32 %v254, %v256
        %v258 = vrot.slane %v236, %v257
        %vm259 = vcmask 130112
        %v260 = vsel %vm259, %v258, %v253
        %v261 = vadd.s32 %v249, 4294967280
        %v262 = vlaneseq
        %v263 = vshrl.u32 %v262, 7
        %v264 = vsub.s32 %v261, %v263
        %v265 = vrot.slane %v237, %v264
        %vm266 = vcmask 195712
        %v267 = vsel %vm266, %v265, %v260
        %v268 = vadd.s32 %v249, 4294967272
        %v269 = vlaneseq
        %v270 = vshrl.u32 %v269, 7
        %v271 = vsub.s32 %v268, %v270
        %v272 = vrot.slane %v238, %v271
        %vm273 = vcmask 261312
        %v274 = vsel %vm273, %v272, %v267
        %vm275 = vcmask 261120
        %v276 = vsel %vm275, %v274, 0
        %278 = vmatprep.subr.mxu0 0.0
        %279 = vmatpush1.msra.mxu0 %v239
        %280 = vmatprep.subr.mxu0 0.0
        %281 = vmatpush1.msra.mxu0 %v240
        %282 = vmatprep.subr.mxu0 0.0
        %283 = vmatpush1.msra.mxu0 %v241
        %284 = vmatprep.subr.mxu0 0.0
        %285 = vmatpush1.msra.mxu0 %v242
        %286 = vmatprep.subr.mxu0 0.0
        %287 = vmatpush1.msra.mxu0 0.0
        %288 = vmatprep.subr.mxu0 0.0
        %289 = vmatpush1.msra.mxu0 0.0
        %290 = vmatprep.subr.mxu0 0.0
        %291 = vmatpush1.msra.mxu0 0.0
        %292 = vmatprep.subr.mxu0 0.0
        %293 = vmatpush1.msra.mxu0 0.0
        %294 = vmatprep.subr.mxu0 0.0
        %295 = vmatpush1.msra.mxu0 0.0
        %296 = vmatprep.subr.mxu0 0.0
        %297 = vmatpush1.msra.mxu0 0.0
        %298 = vmatprep.subr.mxu0 0.0
        %299 = vmatpush1.msra.mxu0 0.0
        %300 = vmatprep.subr.mxu0 0.0
        %301 = vmatpush1.msra.mxu0 0.0
        %302 = vmatprep.subr.mxu0 0.0
        %303 = vmatpush1.msra.mxu0 0.0
        %304 = vmatprep.subr.mxu0 0.0
        %305 = vmatpush1.msra.mxu0 0.0
        %306 = vmatprep.subr.mxu0 0.0
        %307 = vmatpush1.msra.mxu0 0.0
        %308 = vmatprep.subr.mxu0 0.0
        %309 = vmatpush1.msra.mxu0 0.0
        %310 = vmatprep.subr.mxu0 0.0
        %311 = vmatpush1.msra.mxu0 0.0
        %312 = vmatprep.subr.mxu0 0.0
        %313 = vmatpush1.msra.mxu0 0.0
        %314 = vmatprep.subr.mxu0 0.0
        %315 = vmatpush1.msra.mxu0 0.0
        %316 = vmatprep.subr.mxu0 0.0
        %317 = vmatpush1.msra.mxu0 0.0
        %318 = vmatprep.subr.mxu0 0.0
        %319 = vmatpush1.msra.mxu0 0.0
        %320 = vmatprep.subr.mxu0 0.0
        %321 = vmatpush1.msra.mxu0 0.0
        %322 = vmatprep.subr.mxu0 0.0
        %323 = vmatpush1.msra.mxu0 0.0
        %324 = vmatprep.subr.mxu0 0.0
        %325 = vmatpush1.msra.mxu0 0.0
        %326 = vmatprep.subr.mxu0 0.0
        %327 = vmatpush1.msra.mxu0 0.0
        %328 = vmatprep.subr.mxu0 0.0
        %329 = vmatpush1.msra.mxu0 0.0
        %330 = vmatprep.subr.mxu0 0.0
        %331 = vmatpush1.msra.mxu0 0.0
        %332 = vmatprep.subr.mxu0 0.0
        %333 = vmatpush1.msra.mxu0 0.0
        %334 = vmatprep.subr.mxu0 0.0
        %335 = vmatpush1.msra.mxu0 0.0
        %336 = vmatprep.subr.mxu0 0.0
        %337 = vmatpush1.msra.mxu0 0.0
        %338 = vmatprep.subr.mxu0 0.0
        %339 = vmatpush1.msra.mxu0 0.0
        %340 = vmatprep.subr.mxu0 0.0
        %341 = vmatpush1.msra.mxu0 0.0
        %342 = vmatprep.mubr.f32.mxu0 0.0
        %343 = vmatmul.mubr.f32.gmra.mrb[0].mxu0 %v276
        %v344 = vpop.f32.mrb[0].mxu0
        %v345 = vadd.f32 %v243, %v344
        %v346 = vpop.f32.mrb[0].mxu0
        %347 = vdwg.mxu0
        %v348 = vmax.f32 %v345, 0.0
        %v349 = vld [vmem:[%s3] sm:$0xff]
        %v350 = vld [vmem:[%s3 + $0x8] sm:$0xff]
        %v351 = vld [vmem:[%s3 + $0x10] sm:$0xff]
        %v352 = vld [vmem:[%s3 + $0x18] sm:$0xff]
        %v353 = vld [vmem:[%s3 + $0x20] sm:$0xff]
        %v354 = vld [vmem:[%s3 + $0x28] sm:$0xff]
        %v355 = vld [vmem:[%s3 + $0x30] sm:$0xff]
        %v356 = vld [vmem:[%s3 + $0x38] sm:$0xff]
        %v357 = vld [vmem:[%s3 + $0x40] sm:$0xff]
        %v358 = vld [vmem:[%s3 + $0x48] sm:$0xff]
        %v359 = vld [vmem:[%s3 + $0x50] sm:$0xff]
        %v360 = vld [vmem:[%s3 + $0x58] sm:$0xff]
        %v361 = vld [vmem:[%s3 + $0x60] sm:$0xff]
        %v362 = vld [vmem:[%s3 + $0x68] sm:$0xff]
        %v363 = vld [vmem:[%s3 + $0x70] sm:$0xff]
        %v364 = vld [vmem:[%s3 + $0x78] sm:$0xff]
        %v365 = vld [vmem:[%s4] sm:$0x1]
        %366 = vmatprep.subr.mxu0 0.0
        %367 = vmatpush1.msra.mxu0 %v349
        %368 = vmatprep.subr.mxu0 0.0
        %369 = vmatpush1.msra.mxu0 %v350
        %370 = vmatprep.subr.mxu0 0.0
        %371 = vmatpush1.msra.mxu0 %v351
        %372 = vmatprep.subr.mxu0 0.0
        %373 = vmatpush1.msra.mxu0 %v352
        %374 = vmatprep.subr.mxu0 0.0
        %375 = vmatpush1.msra.mxu0 %v353
        %376 = vmatprep.subr.mxu0 0.0
        %377 = vmatpush1.msra.mxu0 %v354
        %378 = vmatprep.subr.mxu0 0.0
        %379 = vmatpush1.msra.mxu0 %v355
        %380 = vmatprep.subr.mxu0 0.0
        %381 = vmatpush1.msra.mxu0 %v356
        %382 = vmatprep.subr.mxu0 0.0
        %383 = vmatpush1.msra.mxu0 %v357
        %384 = vmatprep.subr.mxu0 0.0
        %385 = vmatpush1.msra.mxu0 %v358
        %386 = vmatprep.subr.mxu0 0.0
        %387 = vmatpush1.msra.mxu0 %v359
        %388 = vmatprep.subr.mxu0 0.0
        %389 = vmatpush1.msra.mxu0 %v360
        %390 = vmatprep.subr.mxu0 0.0
        %391 = vmatpush1.msra.mxu0 %v361
        %392 = vmatprep.subr.mxu0 0.0
        %393 = vmatpush1.msra.mxu0 %v362
        %394 = vmatprep.subr.mxu0 0.0
        %395 = vmatpush1.msra.mxu0 %v363
        %396 = vmatprep.subr.mxu0 0.0
        %397 = vmatpush1.msra.mxu0 %v364
        %398 = vmatprep.subr.mxu0 0.0
        %399 = vmatpush1.msra.mxu0 0.0
        %400 = vmatprep.subr.mxu0 0.0
        %401 = vmatpush1.msra.mxu0 0.0
        %402 = vmatprep.subr.mxu0 0.0
        %403 = vmatpush1.msra.mxu0 0.0
        %404 = vmatprep.subr.mxu0 0.0
        %405 = vmatpush1.msra.mxu0 0.0
        %406 = vmatprep.subr.mxu0 0.0
        %407 = vmatpush1.msra.mxu0 0.0
        %408 = vmatprep.subr.mxu0 0.0
        %409 = vmatpush1.msra.mxu0 0.0
        %410 = vmatprep.subr.mxu0 0.0
        %411 = vmatpush1.msra.mxu0 0.0
        %412 = vmatprep.subr.mxu0 0.0
        %413 = vmatpush1.msra.mxu0 0.0
        %414 = vmatprep.subr.mxu0 0.0
        %415 = vmatpush1.msra.mxu0 0.0
        %416 = vmatprep.subr.mxu0 0.0
        %417 = vmatpush1.msra.mxu0 0.0
        %418 = vmatprep.subr.mxu0 0.0
        %419 = vmatpush1.msra.mxu0 0.0
        %420 = vmatprep.subr.mxu0 0.0
        %421 = vmatpush1.msra.mxu0 0.0
        %422 = vmatprep.subr.mxu0 0.0
        %423 = vmatpush1.msra.mxu0 0.0
        %424 = vmatprep.subr.mxu0 0.0
        %425 = vmatpush1.msra.mxu0 0.0
        %426 = vmatprep.subr.mxu0 0.0
        %427 = vmatpush1.msra.mxu0 0.0
        %428 = vmatprep.subr.mxu0 0.0
        %429 = vmatpush1.msra.mxu0 0.0
        %430 = vmatprep.mubr.f32.mxu0 0.0
        %431 = vmatmul.mubr.f32.gmra.mrb[0].mxu0 %v348
        %v432 = vpop.f32.mrb[0].mxu0
        %v433 = vadd.f32 %v365, %v432
        %v434 = vpop.f32.mrb[0].mxu0
        %435 = vdwg.mxu0
        %v436 = vxor.u32 %v433, 2147483648
        %v437 = vmul.f32 %v436, 1.442695
        %v438 = vpow.pop %v437
        %v439 = vadd.f32 %v438, 1.0
        %v440 = vrcp.pop %v439
        %v441 = vmul.f32 1.0, %v440
        %v442 = vlaneseq
        %v443 = vshrl.u32 %v442, 7
        %v444 = vsub.s32 0, %v443
        %v445 = vrot.slane %v441, %v444
        %447 = vbcast.lane.b32.xlu0 %v445, 256
        %v448 = vpop.permute.xlu0 %447
        %s450 = sor.u32 256, 8
        %451 = vbcast.lane.b32.xlu0 %v445, %s450
        %v452 = vpop.permute.xlu0 %451
        %s454 = sor.u32 256, 16
        %455 = vbcast.lane.b32.xlu0 %v445, %s454
        %v456 = vpop.permute.xlu0 %455
        %s458 = sor.u32 256, 24
        %459 = vbcast.lane.b32.xlu0 %v445, %s458
        %v460 = vpop.permute.xlu0 %459
        %v461 = vmul.f32 %v223, %v448
        %v462 = vmul.f32 %v224, %v452
        %v463 = vmul.f32 %v225, %v456
        %v464 = vmul.f32 %v226, %v460
        %465 = vst [vmem:[%s217] sm:$0xff] %v461
        %466 = vst [vmem:[%s217 + $0x8] sm:$0xff] %v462
        %467 = vst [vmem:[%s217 + $0x10] sm:$0xff] %v463
        %468 = vst [vmem:[%s217 + $0x18] sm:$0xff] %v464
        %s469 = sand.u32 %s137, 1
        %s470 = scalar_lea.sflag [#allocation3], %s469
        %s471 = sand.u32 %s137, 1
        %s472 = smul.addr %s471, 32
        %s473 = scalar_lea.vmem [#allocation2], %s472
        // Predicated region
        $region41: #{tpu_custom_call.1} parent=39 // pred_check
          %p474 = pneg %p147
        $region42: #{tpu_custom_call.1} parent=39 // pred_check_branch
          %476 = sbr.rel (%p474) target = $region44
        $region43: #{tpu_custom_call.1} parent=39 // pred_region
          %s478 = ssub.s32 512, 512
          %479 = vsyncadd %s470, %s478
          %s480 = smul.addr %s19, 4
          %s481 = smul.addr %s480, 128
          %s482 = scalar_lea.hbm %s5, %s481
          %s483 = sshll.u32 %s473, 4
          %s484 = int_to_ptr.vmem [resolvable:$true] %s483
          %489 = dma.vmem_to_hbm [thread:$0]  %s484, 512, %s482, %s470, 128, 128, 8
        $region44: #{tpu_custom_call.1} parent=39 // pred_fallthru
          _
      $region40: #{tpu_custom_call.1} parent=5 // pred_fallthru
        _
      %p490 = scmp.le.s32.totalorder 2, %s14
      // Predicated region
      $region45: #{tpu_custom_call.1} parent=5 // pred_check
        %p491 = pneg %p490
      $region46: #{tpu_custom_call.1} parent=5 // pred_check_branch
        %493 = sbr.rel (%p491) target = $region48
      $region47: #{tpu_custom_call.1} parent=5 // pred_region
        %s494 = ssub.s32 %s14, 2
        // Predicated region
        $region49: #{tpu_custom_call.1} parent=47 // pred_check
          %p495 = pneg %p153
        $region50: #{tpu_custom_call.1} parent=47 // pred_check_branch
          %497 = sbr.rel (%p495) target = $region52
        $region51: #{tpu_custom_call.1} parent=47 // pred_region
          %s498 = sand.u32 %s138, 1
          %s499 = scalar_lea.sflag [#allocation3], %s498
          %s500 = sand.u32 %s138, 1
          %s501 = smul.addr %s500, 32
          %s502 = scalar_lea.vmem [#allocation2], %s501
          %503 = dma.done %s499, 512
        $region52: #{tpu_custom_call.1} parent=47 // pred_fallthru
          _
      $region48: #{tpu_custom_call.1} parent=5 // pred_fallthru
        _
    $region6: #{tpu_custom_call.1} parent=1 // loop_footer
      %s18 = sadd.s32 1, %s14
    $region7: #{tpu_custom_call.1} parent=1 // loop_footer_branch
      %13 = sbr.rel target = $region3
    $region8: #{tpu_custom_call.1} parent=1 // loop_exit
      _
    %504 = vsyncpa [#allocation3], 1
    %s505 = scalar_lea.sflag [#allocation3], 1
    %506 = vsyncpa %s505, 1

</llo_original>
